<compile_context>
chip_gen: v7x
topology: tpu7x:2x2x1
jax: 0.10.0
libtpu: 0.0.40
codegen_flags: <defaults>
</compile_context>

<pallas_src>
import functools
import math

import jax
import jax.numpy as jnp
from jax import lax
from jax.experimental import pallas as pl
from jax.experimental.pallas import tpu as pltpu


_LANE = 128
# Scoped VMEM limit: above the 16/32 MiB defaults, below v7x's 64 MiB physical.
_VMEM_LIMIT_BYTES = 48 * 1024 * 1024
# Budget we allow the pipelined blocks + in-kernel f32 temporaries to use.
_VMEM_BLOCK_BUDGET = 36 * 1024 * 1024


def _round_up(n: int, m: int) -> int:
    return ((n + m - 1) // m) * m


def _sublane_pack(dtype) -> int:
    # Native sublane packing: 8 rows (4-byte), 16 (2-byte), 32 (1-byte).
    return max(8, 32 // jnp.dtype(dtype).itemsize)


def _pick_row_tile(n_rows: int, lane_width: int, dtype) -> int:
    """Rows per block, sized against the *padded* lane width incl. f32 temps."""
    itemsize = jnp.dtype(dtype).itemsize
    pack = _sublane_pack(dtype)
    padded_w = _round_up(lane_width, _LANE)
    # Double-buffered input + output (native dtype) plus ~3 f32-sized
    # temporaries (cast, centered, broadcast stats) live at once per row.
    vmem_per_row = 4 * padded_w * itemsize + 3 * padded_w * 4
    rt = _VMEM_BLOCK_BUDGET // vmem_per_row
    rt = max(pack, (rt // pack) * pack)
    rt = min(rt, _round_up(n_rows, pack))
    return rt


def _layernorm_kernel(x_ref, g_ref, b_ref, o_ref, *, eps: float):
    # Direct path: x_ref is (ROW_TILE, SIZE) with SIZE a multiple of 128 (or a
    # fallback size); g_ref / b_ref are (1, SIZE) in float32.
    x = x_ref[...].astype(jnp.float32)
    mean = jnp.mean(x, axis=-1, keepdims=True)
    centered = x - mean
    var = jnp.mean(centered * centered, axis=-1, keepdims=True)
    inv = lax.rsqrt(var + eps)
    o_ref[...] = (centered * inv * g_ref[...] + b_ref[...]).astype(o_ref.dtype)


def _layernorm_packed_kernel(x_ref, g_ref, b_ref, seg_ref, segt_ref, o_ref,
                             *, eps: float, size: int):
    # Packed path: x_ref is (ROW_TILE, L) where each packed row holds
    # L // size consecutive logical rows laid out lane-dense.
    # seg_ref: (L, rpp) block-diagonal 0/1 indicator; segt_ref: (rpp, L).
    x = x_ref[...].astype(jnp.float32)
    seg = seg_ref[...]
    segt = segt_ref[...]
    inv_n = jnp.float32(1.0 / size)
    # Per-logical-row sums via indicator matmuls on the (otherwise idle) MXU,
    # broadcast back to the lanes.  Two-pass form == nn.LayerNorm numerics.
    row_sum = jnp.dot(x, seg, preferred_element_type=jnp.float32)
    mean = jnp.dot(row_sum, segt, preferred_element_type=jnp.float32) * inv_n
    centered = x - mean
    sq_sum = jnp.dot(centered * centered, seg, preferred_element_type=jnp.float32)
    var = jnp.dot(sq_sum, segt, preferred_element_type=jnp.float32) * inv_n
    inv = lax.rsqrt(var + eps)
    o_ref[...] = (centered * inv * g_ref[...] + b_ref[...]).astype(o_ref.dtype)


def prenorm(x, gamma, beta, *, eps: float = 1e-5):
    """LayerNorm over the last dim of x, equivalent to PyTorch PreNorm.forward."""
    orig_shape = x.shape
    size = orig_shape[-1]
    x2 = x.reshape(-1, size)  # contiguous reshape: free
    rows = x2.shape[0]

    compiler_params = pltpu.CompilerParams(
        # TODO(synk): on v7x verify the 1-D row grid shards across both
        # TensorCores; if one TC idles, switch to an explicit CORE_PARALLEL /
        # core_map split.
        dimension_semantics=("parallel",),
        vmem_limit_bytes=_VMEM_LIMIT_BYTES,
    )

    l_base = (size * _LANE) // math.gcd(size, _LANE)  # lcm(size, 128)
    use_packed = (size % _LANE != 0) and (l_base <= 1024)

    if use_packed:
        # Pack rpp logical rows per lane-dense packed row of ~512 lanes.
        L = l_base * max(1, 512 // l_base)
        rpp = L // size

        padded_rows = _round_up(rows, rpp)
        if padded_rows != rows:
            # TODO(synk): the zero-pad is one extra HBM pass; a prefix/remainder
            # split would avoid it for huge ragged inputs.
            x2 = jnp.pad(x2, ((0, padded_rows - rows), (0, 0)))
        xp = x2.reshape(padded_rows // rpp, L)  # row-major reshape: free
        n_p = xp.shape[0]

        # Affine params tiled across the packed lane width, f32 once here.
        g_p = jnp.tile(gamma.astype(jnp.float32).reshape(1, size), (1, rpp))
        b_p = jnp.tile(beta.astype(jnp.float32).reshape(1, size), (1, rpp))

        # Block-diagonal segment-sum indicator and its transpose (built once in
        # the wrapper; constant block index so Pallas DMAs it only once).
        lane = jnp.arange(L, dtype=jnp.int32)
        seg = (lane[:, None] // size
               == jnp.arange(rpp, dtype=jnp.int32)[None, :]).astype(jnp.float32)
        seg_t = jnp.transpose(seg)

        rt = _pick_row_tile(n_p, L, x.dtype)
        grid = (pl.cdiv(n_p, rt),)
        kernel = functools.partial(_layernorm_packed_kernel, eps=eps, size=size)

        out = pl.pallas_call(
            kernel,
            out_shape=jax.ShapeDtypeStruct((n_p, L), x.dtype),
            grid_spec=pltpu.PrefetchScalarGridSpec(
                num_scalar_prefetch=0,
                grid=grid,
                in_specs=[
                    pl.BlockSpec((rt, L), lambda i: (i, 0)),
                    pl.BlockSpec((1, L), lambda i: (0, 0)),
                    pl.BlockSpec((1, L), lambda i: (0, 0)),
                    pl.BlockSpec((L, rpp), lambda i: (0, 0)),
                    pl.BlockSpec((rpp, L), lambda i: (0, 0)),
                ],
                out_specs=pl.BlockSpec((rt, L), lambda i: (i, 0)),
            ),
            compiler_params=compiler_params,
        )(xp, g_p, b_p, seg, seg_t)

        out = out.reshape(padded_rows, size)
        if padded_rows != rows:
            out = out[:rows]
        return out.reshape(orig_shape)

    # Direct path: size already a multiple of 128 (lane-dense), or packing not
    # worthwhile for this size.
    g2 = gamma.reshape(1, size).astype(jnp.float32)
    b2 = beta.reshape(1, size).astype(jnp.float32)

    rt = _pick_row_tile(rows, size, x.dtype)
    grid = (pl.cdiv(rows, rt),)
    kernel = functools.partial(_layernorm_kernel, eps=eps)

    out = pl.pallas_call(
        kernel,
        out_shape=jax.ShapeDtypeStruct((rows, size), x.dtype),
        grid_spec=pltpu.PrefetchScalarGridSpec(
            num_scalar_prefetch=0,
            grid=grid,
            in_specs=[
                pl.BlockSpec((rt, size), lambda i: (i, 0)),
                pl.BlockSpec((1, size), lambda i: (0, 0)),
                pl.BlockSpec((1, size), lambda i: (0, 0)),
            ],
            out_specs=pl.BlockSpec((rt, size), lambda i: (i, 0)),
        ),
        compiler_params=compiler_params,
    )(x2, g2, b2)

    return out.reshape(orig_shape)


def prenorm_reference(x, gamma, beta, eps=1e-5):
    xf = x.astype(jnp.float32)
    mean = jnp.mean(xf, axis=-1, keepdims=True)
    var = jnp.mean((xf - mean) ** 2, axis=-1, keepdims=True)
    y = (xf - mean) * lax.rsqrt(var + eps)
    y = y * gamma.astype(jnp.float32) + beta.astype(jnp.float32)
    return y.astype(x.dtype)


if __name__ == "__main__":
    key = jax.random.PRNGKey(0)
    k1, k2, k3, k4 = jax.random.split(key, 4)

    cases = []
    # Primary case: (batch=2, seq=8, size=32), f32 -> packed path (L=512, rpp=16).
    cases.append((jax.random.normal(k1, (2, 8, 32), dtype=jnp.float32), 1e-5, 1e-5))
    # Ragged row count (14 rows) + size=48 -> packed path (L=384, rpp=8) with pad.
    cases.append((jax.random.normal(k2, (2, 7, 48), dtype=jnp.float32), 1e-5, 1e-5))
    # bf16 transformer-style input -> packed path, exercises bf16 sublane packing.
    x_bf16 = jax.random.normal(k3, (2, 8, 64), dtype=jnp.float32).astype(jnp.bfloat16)
    cases.append((x_bf16, 1e-2, 2e-2))
    # Lane-dense feature size -> direct path.
    cases.append((jax.random.normal(k4, (2, 8, 256), dtype=jnp.float32), 1e-5, 1e-5))

    for x, atol, rtol in cases:
        size = x.shape[-1]
        # PyTorch nn.LayerNorm(size) default init: weight=ones, bias=zeros.
        gamma = jnp.ones((size,), dtype=x.dtype)
        beta = jnp.zeros((size,), dtype=x.dtype)

        y = jax.block_until_ready(prenorm(x, gamma, beta))
        y_ref = prenorm_reference(x, gamma, beta)

        assert y.shape == x.shape and y.dtype == x.dtype
        assert jnp.allclose(
            y.astype(jnp.float32), y_ref.astype(jnp.float32), atol=atol, rtol=rtol
        ), f"mismatch vs reference for shape {x.shape} dtype {x.dtype}"

    print("KERNEL_OK")
</pallas_src>

<mosaic_0001>
module attributes {stable_mosaic.version = 11 : i64} {
  func.func @_layernorm_packed_kernel(%arg0: i32, %arg1: memref<8x512xf32, #tpu.memory_space<vmem>>, %arg2: memref<1x512xf32, #tpu.memory_space<vmem>>, %arg3: memref<1x512xf32, #tpu.memory_space<vmem>>, %arg4: memref<512x16xf32, #tpu.memory_space<vmem>>, %arg5: memref<16x512xf32, #tpu.memory_space<vmem>>, %arg6: memref<8x512xf32, #tpu.memory_space<vmem>>) attributes {dimension_semantics = [#tpu.dimension_semantics<parallel>], iteration_bounds = array<i64: 1>, scalar_prefetch = 0 : i64, scratch_operands = 0 : i64, tpu.core_type = #tpu.core_type<tc>, window_params = [{transform_indices = @transform_0, window_bounds = array<i64: 8, 512>}, {pipeline_mode = #tpu.pipeline_mode<synchronous>, transform_indices = @transform_1, window_bounds = array<i64: 1, 512>}, {pipeline_mode = #tpu.pipeline_mode<synchronous>, transform_indices = @transform_2, window_bounds = array<i64: 1, 512>}, {pipeline_mode = #tpu.pipeline_mode<synchronous>, transform_indices = @transform_3, window_bounds = array<i64: 512, 16>}, {pipeline_mode = #tpu.pipeline_mode<synchronous>, transform_indices = @transform_4, window_bounds = array<i64: 16, 512>}, {transform_indices = @transform_5, window_bounds = array<i64: 8, 512>}]} {
    %c0 = arith.constant 0 : index
    %c0_0 = arith.constant 0 : index
    %0 = vector.load %arg1[%c0, %c0_0] : memref<8x512xf32, #tpu.memory_space<vmem>>, vector<8x512xf32>
    %c0_1 = arith.constant 0 : index
    %c0_2 = arith.constant 0 : index
    %1 = vector.load %arg4[%c0_1, %c0_2] : memref<512x16xf32, #tpu.memory_space<vmem>>, vector<512x16xf32>
    %c0_3 = arith.constant 0 : index
    %c0_4 = arith.constant 0 : index
    %2 = vector.load %arg5[%c0_3, %c0_4] : memref<16x512xf32, #tpu.memory_space<vmem>>, vector<16x512xf32>
    %cst = arith.constant dense<0.000000e+00> : vector<8x16xf32>
    %3 = tpu.matmul %0, %1, %cst {dimension_numbers = #tpu.dot_dimension_numbers<[1], [0], [0], [1], [0, 0, 1, 1], [], []>} : vector<8x512xf32>, vector<512x16xf32>, vector<8x16xf32> -> vector<8x16xf32>
    %cst_5 = arith.constant dense<0.000000e+00> : vector<8x512xf32>
    %4 = tpu.matmul %3, %2, %cst_5 {dimension_numbers = #tpu.dot_dimension_numbers<[1], [0], [0], [1], [0, 0, 1, 1], [], []>} : vector<8x16xf32>, vector<16x512xf32>, vector<8x512xf32> -> vector<8x512xf32>
    %cst_6 = arith.constant 3.125000e-02 : f32
    %5 = vector.broadcast %cst_6 : f32 to vector<8x512xf32>
    %6 = arith.mulf %4, %5 : vector<8x512xf32>
    %7 = arith.subf %0, %6 : vector<8x512xf32>
    %8 = arith.mulf %7, %7 : vector<8x512xf32>
    %cst_7 = arith.constant dense<0.000000e+00> : vector<8x16xf32>
    %9 = tpu.matmul %8, %1, %cst_7 {dimension_numbers = #tpu.dot_dimension_numbers<[1], [0], [0], [1], [0, 0, 1, 1], [], []>} : vector<8x512xf32>, vector<512x16xf32>, vector<8x16xf32> -> vector<8x16xf32>
    %cst_8 = arith.constant dense<0.000000e+00> : vector<8x512xf32>
    %10 = tpu.matmul %9, %2, %cst_8 {dimension_numbers = #tpu.dot_dimension_numbers<[1], [0], [0], [1], [0, 0, 1, 1], [], []>} : vector<8x16xf32>, vector<16x512xf32>, vector<8x512xf32> -> vector<8x512xf32>
    %cst_9 = arith.constant 3.125000e-02 : f32
    %11 = vector.broadcast %cst_9 : f32 to vector<8x512xf32>
    %12 = arith.mulf %10, %11 : vector<8x512xf32>
    %cst_10 = arith.constant 9.99999974E-6 : f32
    %13 = vector.broadcast %cst_10 : f32 to vector<8x512xf32>
    %14 = arith.addf %12, %13 : vector<8x512xf32>
    %15 = math.rsqrt %14 : vector<8x512xf32>
    %16 = arith.mulf %7, %15 : vector<8x512xf32>
    %c0_11 = arith.constant 0 : index
    %c0_12 = arith.constant 0 : index
    %17 = vector.load %arg2[%c0_11, %c0_12] : memref<1x512xf32, #tpu.memory_space<vmem>>, vector<1x512xf32>
    %18 = vector.broadcast %17 : vector<1x512xf32> to vector<8x512xf32>
    %19 = arith.mulf %16, %18 : vector<8x512xf32>
    %c0_13 = arith.constant 0 : index
    %c0_14 = arith.constant 0 : index
    %20 = vector.load %arg3[%c0_13, %c0_14] : memref<1x512xf32, #tpu.memory_space<vmem>>, vector<1x512xf32>
    %21 = vector.broadcast %20 : vector<1x512xf32> to vector<8x512xf32>
    %22 = arith.addf %19, %21 : vector<8x512xf32>
    %c0_15 = arith.constant 0 : index
    %c0_16 = arith.constant 0 : index
    %23 = vector.load %arg6[%c0_15, %c0_16] : memref<8x512xf32, #tpu.memory_space<vmem>>, vector<8x512xf32>
    tpu.vector_store %arg6[%c0_15, %c0_16], %22 {strides = array<i32>} : memref<8x512xf32, #tpu.memory_space<vmem>>, vector<8x512xf32>,
    return
  }
  func.func @transform_0(%arg0: i32) -> (i32, i32) {
    %c0_i32 = arith.constant 0 : i32
    %c0_i32_0 = arith.constant 0 : i32
    return %arg0, %c0_i32 : i32, i32
  }
  func.func @transform_1(%arg0: i32) -> (i32, i32) {
    %c0_i32 = arith.constant 0 : i32
    %c0_i32_0 = arith.constant 0 : i32
    %c0_i32_1 = arith.constant 0 : i32
    return %c0_i32, %c0_i32_0 : i32, i32
  }
  func.func @transform_2(%arg0: i32) -> (i32, i32) {
    %c0_i32 = arith.constant 0 : i32
    %c0_i32_0 = arith.constant 0 : i32
    %c0_i32_1 = arith.constant 0 : i32
    return %c0_i32, %c0_i32_0 : i32, i32
  }
  func.func @transform_3(%arg0: i32) -> (i32, i32) {
    %c0_i32 = arith.constant 0 : i32
    %c0_i32_0 = arith.constant 0 : i32
    %c0_i32_1 = arith.constant 0 : i32
    return %c0_i32, %c0_i32_0 : i32, i32
  }
  func.func @transform_4(%arg0: i32) -> (i32, i32) {
    %c0_i32 = arith.constant 0 : i32
    %c0_i32_0 = arith.constant 0 : i32
    %c0_i32_1 = arith.constant 0 : i32
    return %c0_i32, %c0_i32_0 : i32, i32
  }
  func.func @transform_5(%arg0: i32) -> (i32, i32) {
    %c0_i32 = arith.constant 0 : i32
    %c0_i32_0 = arith.constant 0 : i32
    return %arg0, %c0_i32 : i32, i32
  }
}

</mosaic_0001>

<llo_original>
// kernel: tpu_custom_call.1
$region0: #{tpu_custom_call.1}
  #allocation0 [shape = 'u32[]', space=smem, size = 0x4, offset = 0x4, fixed_abs, tag = 'smem constant byte address 0x4 - core index']
  #allocation1 [shape = 'u32[144,128]{1,0:T(1,128)}', space=vmem, size = 0x12000, scoped, tag = 'internal scratch']
  %s0 = inlined_call_operand.vmem [shape: f32[1,512], index: 0, kind: input, shape index: {}]
  %s1 = inlined_call_operand.vmem [shape: f32[1,512], index: 1, kind: input, shape index: {}]
  %s2 = inlined_call_operand.vmem [shape: f32[1,512], index: 2, kind: input, shape index: {}]
  %s3 = inlined_call_operand.vmem [shape: f32[512,16], index: 3, kind: input, shape index: {}]
  %s4 = inlined_call_operand.vmem [shape: f32[16,512], index: 4, kind: input, shape index: {}]
  %s5 = inlined_call_operand.hbm [shape: f32[1,512], index: 5, kind: output, shape index: {}]
  %s6 = sld [smem:[#allocation0]]
  $region30: #{tpu_custom_call.1} parent=0
    _
  %s8 = ssub.s32 1, %s6
  %s9 = scalar_select 0, %s8, %s6
  $region1: #{tpu_custom_call.1} parent=0
    #allocation2 [shape = 'u8[16384]{0}', space=vmem, size = 0x4000, scoped, tag = 'output window, operand 0, single buffered']
    #allocation3 [shape = 's32[1]{0}', space=sflag, size = 0x4, scoped, tag = 'scoped memory for tpu_custom_call.1']
    %10 = vsyncpa [#allocation3], 0
    // Predicated region
    $region2: #{tpu_custom_call.1} parent=1 // pred_check
      _
    $region3: #{tpu_custom_call.1} parent=1 // pred_check_branch
      %12 = sbr.rel (0) target = $region5
    $region4: #{tpu_custom_call.1} parent=1 // pred_region
      _
    $region5: #{tpu_custom_call.1} parent=1 // pred_fallthru
      _
    // Predicated region
    $region6: #{tpu_custom_call.1} parent=1 // pred_check
      _
    $region7: #{tpu_custom_call.1} parent=1 // pred_check_branch
      %14 = sbr.rel (0) target = $region9
    $region8: #{tpu_custom_call.1} parent=1 // pred_region
      _
    $region9: #{tpu_custom_call.1} parent=1 // pred_fallthru
      _
    // Predicated region
    $region10: #{tpu_custom_call.1} parent=1 // pred_check
      _
    $region11: #{tpu_custom_call.1} parent=1 // pred_check_branch
      %16 = sbr.rel (0) target = $region13
    $region12: #{tpu_custom_call.1} parent=1 // pred_region
      _
    $region13: #{tpu_custom_call.1} parent=1 // pred_fallthru
      _
    // Predicated region
    $region14: #{tpu_custom_call.1} parent=1 // pred_check
      _
    $region15: #{tpu_custom_call.1} parent=1 // pred_check_branch
      %18 = sbr.rel (0) target = $region17
    $region16: #{tpu_custom_call.1} parent=1 // pred_region
      _
    $region17: #{tpu_custom_call.1} parent=1 // pred_fallthru
      _
    // Predicated region
    $region18: #{tpu_custom_call.1} parent=1 // pred_check
      _
    $region19: #{tpu_custom_call.1} parent=1 // pred_check_branch
      %20 = sbr.rel (0) target = $region21
    $region20: #{tpu_custom_call.1} parent=1 // pred_region
      _
    $region21: #{tpu_custom_call.1} parent=1 // pred_fallthru
      _
    %v21 = vld [vmem:[%s0] sm:$0xf]
    %v22 = vld [vmem:[%s0 + $0x4] sm:$0xf]
    %v23 = vld [vmem:[%s0 + $0x8] sm:$0xf]
    %v24 = vld [vmem:[%s0 + $0xc] sm:$0xf]
    %v25 = vld [vmem:[%s0 + $0x10] sm:$0xf]
    %v26 = vld [vmem:[%s0 + $0x14] sm:$0xf]
    %v27 = vld [vmem:[%s0 + $0x18] sm:$0xf]
    %v28 = vld [vmem:[%s0 + $0x1c] sm:$0xf]
    %v29 = vld [vmem:[%s3] sm:$0xff]
    %v30 = vld [vmem:[%s3 + $0x8] sm:$0xff]
    %v31 = vld [vmem:[%s3 + $0x10] sm:$0xff]
    %v32 = vld [vmem:[%s3 + $0x18] sm:$0xff]
    %v33 = vld [vmem:[%s3 + $0x20] sm:$0xff]
    %v34 = vld [vmem:[%s3 + $0x28] sm:$0xff]
    %v35 = vld [vmem:[%s3 + $0x30] sm:$0xff]
    %v36 = vld [vmem:[%s3 + $0x38] sm:$0xff]
    %v37 = vld [vmem:[%s3 + $0x40] sm:$0xff]
    %v38 = vld [vmem:[%s3 + $0x48] sm:$0xff]
    %v39 = vld [vmem:[%s3 + $0x50] sm:$0xff]
    %v40 = vld [vmem:[%s3 + $0x58] sm:$0xff]
    %v41 = vld [vmem:[%s3 + $0x60] sm:$0xff]
    %v42 = vld [vmem:[%s3 + $0x68] sm:$0xff]
    %v43 = vld [vmem:[%s3 + $0x70] sm:$0xff]
    %v44 = vld [vmem:[%s3 + $0x78] sm:$0xff]
    %v45 = vld [vmem:[%s3 + $0x80] sm:$0xff]
    %v46 = vld [vmem:[%s3 + $0x88] sm:$0xff]
    %v47 = vld [vmem:[%s3 + $0x90] sm:$0xff]
    %v48 = vld [vmem:[%s3 + $0x98] sm:$0xff]
    %v49 = vld [vmem:[%s3 + $0xa0] sm:$0xff]
    %v50 = vld [vmem:[%s3 + $0xa8] sm:$0xff]
    %v51 = vld [vmem:[%s3 + $0xb0] sm:$0xff]
    %v52 = vld [vmem:[%s3 + $0xb8] sm:$0xff]
    %v53 = vld [vmem:[%s3 + $0xc0] sm:$0xff]
    %v54 = vld [vmem:[%s3 + $0xc8] sm:$0xff]
    %v55 = vld [vmem:[%s3 + $0xd0] sm:$0xff]
    %v56 = vld [vmem:[%s3 + $0xd8] sm:$0xff]
    %v57 = vld [vmem:[%s3 + $0xe0] sm:$0xff]
    %v58 = vld [vmem:[%s3 + $0xe8] sm:$0xff]
    %v59 = vld [vmem:[%s3 + $0xf0] sm:$0xff]
    %v60 = vld [vmem:[%s3 + $0xf8] sm:$0xff]
    %v61 = vld [vmem:[%s3 + $0x100] sm:$0xff]
    %v62 = vld [vmem:[%s3 + $0x108] sm:$0xff]
    %v63 = vld [vmem:[%s3 + $0x110] sm:$0xff]
    %v64 = vld [vmem:[%s3 + $0x118] sm:$0xff]
    %v65 = vld [vmem:[%s3 + $0x120] sm:$0xff]
    %v66 = vld [vmem:[%s3 + $0x128] sm:$0xff]
    %v67 = vld [vmem:[%s3 + $0x130] sm:$0xff]
    %v68 = vld [vmem:[%s3 + $0x138] sm:$0xff]
    %v69 = vld [vmem:[%s3 + $0x140] sm:$0xff]
    %v70 = vld [vmem:[%s3 + $0x148] sm:$0xff]
    %v71 = vld [vmem:[%s3 + $0x150] sm:$0xff]
    %v72 = vld [vmem:[%s3 + $0x158] sm:$0xff]
    %v73 = vld [vmem:[%s3 + $0x160] sm:$0xff]
    %v74 = vld [vmem:[%s3 + $0x168] sm:$0xff]
    %v75 = vld [vmem:[%s3 + $0x170] sm:$0xff]
    %v76 = vld [vmem:[%s3 + $0x178] sm:$0xff]
    %v77 = vld [vmem:[%s3 + $0x180] sm:$0xff]
    %v78 = vld [vmem:[%s3 + $0x188] sm:$0xff]
    %v79 = vld [vmem:[%s3 + $0x190] sm:$0xff]
    %v80 = vld [vmem:[%s3 + $0x198] sm:$0xff]
    %v81 = vld [vmem:[%s3 + $0x1a0] sm:$0xff]
    %v82 = vld [vmem:[%s3 + $0x1a8] sm:$0xff]
    %v83 = vld [vmem:[%s3 + $0x1b0] sm:$0xff]
    %v84 = vld [vmem:[%s3 + $0x1b8] sm:$0xff]
    %v85 = vld [vmem:[%s3 + $0x1c0] sm:$0xff]
    %v86 = vld [vmem:[%s3 + $0x1c8] sm:$0xff]
    %v87 = vld [vmem:[%s3 + $0x1d0] sm:$0xff]
    %v88 = vld [vmem:[%s3 + $0x1d8] sm:$0xff]
    %v89 = vld [vmem:[%s3 + $0x1e0] sm:$0xff]
    %v90 = vld [vmem:[%s3 + $0x1e8] sm:$0xff]
    %v91 = vld [vmem:[%s3 + $0x1f0] sm:$0xff]
    %v92 = vld [vmem:[%s3 + $0x1f8] sm:$0xff]
    %v93 = vld [vmem:[%s4] sm:$0xff]
    %v94 = vld [vmem:[%s4 + $0x8] sm:$0xff]
    %v95 = vld [vmem:[%s4 + $0x10] sm:$0xff]
    %v96 = vld [vmem:[%s4 + $0x18] sm:$0xff]
    %v97 = vld [vmem:[%s4 + $0x20] sm:$0xff]
    %v98 = vld [vmem:[%s4 + $0x28] sm:$0xff]
    %v99 = vld [vmem:[%s4 + $0x30] sm:$0xff]
    %v100 = vld [vmem:[%s4 + $0x38] sm:$0xff]
    %v109 = vcombine.low %v21, %v22
    %v110 = vcombine.low %v23, %v24
    %v111 = vcombine.low %v25, %v26
    %v112 = vcombine.low %v27, %v28
    %v114 = vunpack.c.l.s4 1966171168
    %v115 = vunpack.c.0.s8 %v114
    %v116 = vlaneseq
    %v117 = vshrl.u32 %v116, 7
    %v118 = vsub.s32 %v115, %v117
    %v119 = vrot.slane %v109, %v118
    %v121 = vunpack.c.l.s4 1966171168
    %v122 = vunpack.c.0.s8 %v121
    %v123 = vlaneseq
    %v124 = vshrl.u32 %v123, 7
    %v125 = vsub.s32 %v122, %v124
    %v126 = vrot.slane %v110, %v125
    %v128 = vunpack.c.l.s4 1966171168
    %v129 = vunpack.c.0.s8 %v128
    %v130 = vlaneseq
    %v131 = vshrl.u32 %v130, 7
    %v132 = vsub.s32 %v129, %v131
    %v133 = vrot.slane %v111, %v132
    %v135 = vunpack.c.l.s4 1966171168
    %v136 = vunpack.c.0.s8 %v135
    %v137 = vlaneseq
    %v138 = vshrl.u32 %v137, 7
    %v139 = vsub.s32 %v136, %v138
    %v140 = vrot.slane %v112, %v139
    %v141 = vcombine.low %v119, %v126
    %v142 = vcombine.high %v119, %v126
    %v143 = vcombine.low %v133, %v140
    %v144 = vcombine.high %v133, %v140
    %v146 = vunpack.c.l.s4 1966171168
    %v147 = vunpack.c.0.s8 %v146
    %v148 = vlaneseq
    %v149 = vshrl.u32 %v148, 7
    %v150 = vsub.s32 %v147, %v149
    %v151 = vrot.slane %v141, %v150
    %v153 = vunpack.c.l.s4 1966171168
    %v154 = vunpack.c.0.s8 %v153
    %v155 = vlaneseq
    %v156 = vshrl.u32 %v155, 7
    %v157 = vsub.s32 %v154, %v156
    %v158 = vrot.slane %v142, %v157
    %v160 = vunpack.c.l.s4 1966171168
    %v161 = vunpack.c.0.s8 %v160
    %v162 = vlaneseq
    %v163 = vshrl.u32 %v162, 7
    %v164 = vsub.s32 %v161, %v163
    %v165 = vrot.slane %v143, %v164
    %v167 = vunpack.c.l.s4 1966171168
    %v168 = vunpack.c.0.s8 %v167
    %v169 = vlaneseq
    %v170 = vshrl.u32 %v169, 7
    %v171 = vsub.s32 %v168, %v170
    %v172 = vrot.slane %v144, %v171
    %v173 = vcombine.low %v151, %v165
    %v174 = vcombine.high %v151, %v165
    %v175 = vcombine.low %v158, %v172
    %v176 = vcombine.high %v158, %v172
    %181 = vmatprep.subr.mxu0 0.0
    %182 = vmatpush1.msra.mxu0 %v29
    %183 = vmatprep.subr.mxu0 0.0
    %184 = vmatpush1.msra.mxu0 %v30
    %185 = vmatprep.subr.mxu0 0.0
    %186 = vmatpush1.msra.mxu0 %v31
    %187 = vmatprep.subr.mxu0 0.0
    %188 = vmatpush1.msra.mxu0 %v32
    %189 = vmatprep.subr.mxu0 0.0
    %190 = vmatpush1.msra.mxu0 %v33
    %191 = vmatprep.subr.mxu0 0.0
    %192 = vmatpush1.msra.mxu0 %v34
    %193 = vmatprep.subr.mxu0 0.0
    %194 = vmatpush1.msra.mxu0 %v35
    %195 = vmatprep.subr.mxu0 0.0
    %196 = vmatpush1.msra.mxu0 %v36
    %197 = vmatprep.subr.mxu0 0.0
    %198 = vmatpush1.msra.mxu0 %v37
    %199 = vmatprep.subr.mxu0 0.0
    %200 = vmatpush1.msra.mxu0 %v38
    %201 = vmatprep.subr.mxu0 0.0
    %202 = vmatpush1.msra.mxu0 %v39
    %203 = vmatprep.subr.mxu0 0.0
    %204 = vmatpush1.msra.mxu0 %v40
    %205 = vmatprep.subr.mxu0 0.0
    %206 = vmatpush1.msra.mxu0 %v41
    %207 = vmatprep.subr.mxu0 0.0
    %208 = vmatpush1.msra.mxu0 %v42
    %209 = vmatprep.subr.mxu0 0.0
    %210 = vmatpush1.msra.mxu0 %v43
    %211 = vmatprep.subr.mxu0 0.0
    %212 = vmatpush1.msra.mxu0 %v44
    %213 = vmatprep.subr.mxu0 0.0
    %214 = vmatpush1.msra.mxu0 %v45
    %215 = vmatprep.subr.mxu0 0.0
    %216 = vmatpush1.msra.mxu0 %v46
    %217 = vmatprep.subr.mxu0 0.0
    %218 = vmatpush1.msra.mxu0 %v47
    %219 = vmatprep.subr.mxu0 0.0
    %220 = vmatpush1.msra.mxu0 %v48
    %221 = vmatprep.subr.mxu0 0.0
    %222 = vmatpush1.msra.mxu0 %v49
    %223 = vmatprep.subr.mxu0 0.0
    %224 = vmatpush1.msra.mxu0 %v50
    %225 = vmatprep.subr.mxu0 0.0
    %226 = vmatpush1.msra.mxu0 %v51
    %227 = vmatprep.subr.mxu0 0.0
    %228 = vmatpush1.msra.mxu0 %v52
    %229 = vmatprep.subr.mxu0 0.0
    %230 = vmatpush1.msra.mxu0 %v53
    %231 = vmatprep.subr.mxu0 0.0
    %232 = vmatpush1.msra.mxu0 %v54
    %233 = vmatprep.subr.mxu0 0.0
    %234 = vmatpush1.msra.mxu0 %v55
    %235 = vmatprep.subr.mxu0 0.0
    %236 = vmatpush1.msra.mxu0 %v56
    %237 = vmatprep.subr.mxu0 0.0
    %238 = vmatpush1.msra.mxu0 %v57
    %239 = vmatprep.subr.mxu0 0.0
    %240 = vmatpush1.msra.mxu0 %v58
    %241 = vmatprep.subr.mxu0 0.0
    %242 = vmatpush1.msra.mxu0 %v59
    %243 = vmatprep.subr.mxu0 0.0
    %244 = vmatpush1.msra.mxu0 %v60
    %245 = vmatprep.mubr.f32.mxu0 %v175
    %246 = vmatmul.mubr.f32.gmra.mrb[0].mxu0 %v173
    %v247 = vpop.f32.mrb[0].mxu0
    %v248 = vadd.f32 0.0, %v247
    %v249 = vpop.f32.mrb[0].mxu0
    %250 = vdwg.mxu0
    %251 = vmatprep.subr.mxu0 0.0
    %252 = vmatpush1.msra.mxu0 %v61
    %253 = vmatprep.subr.mxu0 0.0
    %254 = vmatpush1.msra.mxu0 %v62
    %255 = vmatprep.subr.mxu0 0.0
    %256 = vmatpush1.msra.mxu0 %v63
    %257 = vmatprep.subr.mxu0 0.0
    %258 = vmatpush1.msra.mxu0 %v64
    %259 = vmatprep.subr.mxu0 0.0
    %260 = vmatpush1.msra.mxu0 %v65
    %261 = vmatprep.subr.mxu0 0.0
    %262 = vmatpush1.msra.mxu0 %v66
    %263 = vmatprep.subr.mxu0 0.0
    %264 = vmatpush1.msra.mxu0 %v67
    %265 = vmatprep.subr.mxu0 0.0
    %266 = vmatpush1.msra.mxu0 %v68
    %267 = vmatprep.subr.mxu0 0.0
    %268 = vmatpush1.msra.mxu0 %v69
    %269 = vmatprep.subr.mxu0 0.0
    %270 = vmatpush1.msra.mxu0 %v70
    %271 = vmatprep.subr.mxu0 0.0
    %272 = vmatpush1.msra.mxu0 %v71
    %273 = vmatprep.subr.mxu0 0.0
    %274 = vmatpush1.msra.mxu0 %v72
    %275 = vmatprep.subr.mxu0 0.0
    %276 = vmatpush1.msra.mxu0 %v73
    %277 = vmatprep.subr.mxu0 0.0
    %278 = vmatpush1.msra.mxu0 %v74
    %279 = vmatprep.subr.mxu0 0.0
    %280 = vmatpush1.msra.mxu0 %v75
    %281 = vmatprep.subr.mxu0 0.0
    %282 = vmatpush1.msra.mxu0 %v76
    %283 = vmatprep.subr.mxu0 0.0
    %284 = vmatpush1.msra.mxu0 %v77
    %285 = vmatprep.subr.mxu0 0.0
    %286 = vmatpush1.msra.mxu0 %v78
    %287 = vmatprep.subr.mxu0 0.0
    %288 = vmatpush1.msra.mxu0 %v79
    %289 = vmatprep.subr.mxu0 0.0
    %290 = vmatpush1.msra.mxu0 %v80
    %291 = vmatprep.subr.mxu0 0.0
    %292 = vmatpush1.msra.mxu0 %v81
    %293 = vmatprep.subr.mxu0 0.0
    %294 = vmatpush1.msra.mxu0 %v82
    %295 = vmatprep.subr.mxu0 0.0
    %296 = vmatpush1.msra.mxu0 %v83
    %297 = vmatprep.subr.mxu0 0.0
    %298 = vmatpush1.msra.mxu0 %v84
    %299 = vmatprep.subr.mxu0 0.0
    %300 = vmatpush1.msra.mxu0 %v85
    %301 = vmatprep.subr.mxu0 0.0
    %302 = vmatpush1.msra.mxu0 %v86
    %303 = vmatprep.subr.mxu0 0.0
    %304 = vmatpush1.msra.mxu0 %v87
    %305 = vmatprep.subr.mxu0 0.0
    %306 = vmatpush1.msra.mxu0 %v88
    %307 = vmatprep.subr.mxu0 0.0
    %308 = vmatpush1.msra.mxu0 %v89
    %309 = vmatprep.subr.mxu0 0.0
    %310 = vmatpush1.msra.mxu0 %v90
    %311 = vmatprep.subr.mxu0 0.0
    %312 = vmatpush1.msra.mxu0 %v91
    %313 = vmatprep.subr.mxu0 0.0
    %314 = vmatpush1.msra.mxu0 %v92
    %315 = vmatprep.mubr.f32.mxu0 %v176
    %316 = vmatmul.mubr.f32.gmra.mrb[0].mxu0 %v174
    %v317 = vpop.f32.mrb[0].mxu0
    %v318 = vadd.f32 %v248, %v317
    %v319 = vpop.f32.mrb[0].mxu0
    %320 = vdwg.mxu0
    %vm321 = vcmask 130048
    %v323 = vsel %vm321, %v318, 0
    %325 = vmatprep.subr.mxu0 %v94
    %326 = vmatpush1.msra.mxu0 %v93
    %327 = vmatprep.subr.mxu0 %v98
    %328 = vmatpush1.msra.mxu0 %v97
    %329 = vmatprep.subr.mxu0 0.0
    %330 = vmatpush1.msra.mxu0 0.0
    %331 = vmatprep.subr.mxu0 0.0
    %332 = vmatpush1.msra.mxu0 0.0
    %333 = vmatprep.subr.mxu0 0.0
    %334 = vmatpush1.msra.mxu0 0.0
    %335 = vmatprep.subr.mxu0 0.0
    %336 = vmatpush1.msra.mxu0 0.0
    %337 = vmatprep.subr.mxu0 0.0
    %338 = vmatpush1.msra.mxu0 0.0
    %339 = vmatprep.subr.mxu0 0.0
    %340 = vmatpush1.msra.mxu0 0.0
    %341 = vmatprep.subr.mxu0 0.0
    %342 = vmatpush1.msra.mxu0 0.0
    %343 = vmatprep.subr.mxu0 0.0
    %344 = vmatpush1.msra.mxu0 0.0
    %345 = vmatprep.subr.mxu0 0.0
    %346 = vmatpush1.msra.mxu0 0.0
    %347 = vmatprep.subr.mxu0 0.0
    %348 = vmatpush1.msra.mxu0 0.0
    %349 = vmatprep.subr.mxu0 0.0
    %350 = vmatpush1.msra.mxu0 0.0
    %351 = vmatprep.subr.mxu0 0.0
    %352 = vmatpush1.msra.mxu0 0.0
    %353 = vmatprep.subr.mxu0 0.0
    %354 = vmatpush1.msra.mxu0 0.0
    %355 = vmatprep.subr.mxu0 0.0
    %356 = vmatpush1.msra.mxu0 0.0
    %357 = vmatprep.subr.mxu0 0.0
    %358 = vmatpush1.msra.mxu0 0.0
    %359 = vmatprep.subr.mxu0 0.0
    %360 = vmatpush1.msra.mxu0 0.0
    %361 = vmatprep.subr.mxu0 0.0
    %362 = vmatpush1.msra.mxu0 0.0
    %363 = vmatprep.subr.mxu0 0.0
    %364 = vmatpush1.msra.mxu0 0.0
    %365 = vmatprep.subr.mxu0 0.0
    %366 = vmatpush1.msra.mxu0 0.0
    %367 = vmatprep.subr.mxu0 0.0
    %368 = vmatpush1.msra.mxu0 0.0
    %369 = vmatprep.subr.mxu0 0.0
    %370 = vmatpush1.msra.mxu0 0.0
    %371 = vmatprep.subr.mxu0 0.0
    %372 = vmatpush1.msra.mxu0 0.0
    %373 = vmatprep.subr.mxu0 0.0
    %374 = vmatpush1.msra.mxu0 0.0
    %375 = vmatprep.subr.mxu0 0.0
    %376 = vmatpush1.msra.mxu0 0.0
    %377 = vmatprep.subr.mxu0 0.0
    %378 = vmatpush1.msra.mxu0 0.0
    %379 = vmatprep.subr.mxu0 0.0
    %380 = vmatpush1.msra.mxu0 0.0
    %381 = vmatprep.subr.mxu0 0.0
    %382 = vmatpush1.msra.mxu0 0.0
    %383 = vmatprep.subr.mxu0 0.0
    %384 = vmatpush1.msra.mxu0 0.0
    %385 = vmatprep.subr.mxu0 0.0
    %386 = vmatpush1.msra.mxu0 0.0
    %387 = vmatprep.subr.mxu0 0.0
    %388 = vmatpush1.msra.mxu0 0.0
    %389 = vmatprep.mubr.f32.mxu0 0.0
    %390 = vmatmul.mubr.f32.gmra.mrb[0].mxu0 %v323
    %v391 = vpop.f32.mrb[0].mxu0
    %v392 = vadd.f32 0.0, %v391
    %v393 = vpop.f32.mrb[0].mxu0
    %v394 = vadd.f32 0.0, %v393
    %395 = vdwg.mxu0
    %396 = vmatprep.subr.mxu0 %v96
    %397 = vmatpush1.msra.mxu0 %v95
    %398 = vmatprep.subr.mxu0 %v100
    %399 = vmatpush1.msra.mxu0 %v99
    %400 = vmatprep.subr.mxu0 0.0
    %401 = vmatpush1.msra.mxu0 0.0
    %402 = vmatprep.subr.mxu0 0.0
    %403 = vmatpush1.msra.mxu0 0.0
    %404 = vmatprep.subr.mxu0 0.0
    %405 = vmatpush1.msra.mxu0 0.0
    %406 = vmatprep.subr.mxu0 0.0
    %407 = vmatpush1.msra.mxu0 0.0
    %408 = vmatprep.subr.mxu0 0.0
    %409 = vmatpush1.msra.mxu0 0.0
    %410 = vmatprep.subr.mxu0 0.0
    %411 = vmatpush1.msra.mxu0 0.0
    %412 = vmatprep.subr.mxu0 0.0
    %413 = vmatpush1.msra.mxu0 0.0
    %414 = vmatprep.subr.mxu0 0.0
    %415 = vmatpush1.msra.mxu0 0.0
    %416 = vmatprep.subr.mxu0 0.0
    %417 = vmatpush1.msra.mxu0 0.0
    %418 = vmatprep.subr.mxu0 0.0
    %419 = vmatpush1.msra.mxu0 0.0
    %420 = vmatprep.subr.mxu0 0.0
    %421 = vmatpush1.msra.mxu0 0.0
    %422 = vmatprep.subr.mxu0 0.0
    %423 = vmatpush1.msra.mxu0 0.0
    %424 = vmatprep.subr.mxu0 0.0
    %425 = vmatpush1.msra.mxu0 0.0
    %426 = vmatprep.subr.mxu0 0.0
    %427 = vmatpush1.msra.mxu0 0.0
    %428 = vmatprep.subr.mxu0 0.0
    %429 = vmatpush1.msra.mxu0 0.0
    %430 = vmatprep.subr.mxu0 0.0
    %431 = vmatpush1.msra.mxu0 0.0
    %432 = vmatprep.subr.mxu0 0.0
    %433 = vmatpush1.msra.mxu0 0.0
    %434 = vmatprep.subr.mxu0 0.0
    %435 = vmatpush1.msra.mxu0 0.0
    %436 = vmatprep.subr.mxu0 0.0
    %437 = vmatpush1.msra.mxu0 0.0
    %438 = vmatprep.subr.mxu0 0.0
    %439 = vmatpush1.msra.mxu0 0.0
    %440 = vmatprep.subr.mxu0 0.0
    %441 = vmatpush1.msra.mxu0 0.0
    %442 = vmatprep.subr.mxu0 0.0
    %443 = vmatpush1.msra.mxu0 0.0
    %444 = vmatprep.subr.mxu0 0.0
    %445 = vmatpush1.msra.mxu0 0.0
    %446 = vmatprep.subr.mxu0 0.0
    %447 = vmatpush1.msra.mxu0 0.0
    %448 = vmatprep.subr.mxu0 0.0
    %449 = vmatpush1.msra.mxu0 0.0
    %450 = vmatprep.subr.mxu0 0.0
    %451 = vmatpush1.msra.mxu0 0.0
    %452 = vmatprep.subr.mxu0 0.0
    %453 = vmatpush1.msra.mxu0 0.0
    %454 = vmatprep.subr.mxu0 0.0
    %455 = vmatpush1.msra.mxu0 0.0
    %456 = vmatprep.subr.mxu0 0.0
    %457 = vmatpush1.msra.mxu0 0.0
    %458 = vmatprep.subr.mxu0 0.0
    %459 = vmatpush1.msra.mxu0 0.0
    %460 = vmatprep.mubr.f32.mxu0 0.0
    %461 = vmatmul.mubr.f32.gmra.mrb[0].mxu0 %v323
    %v462 = vpop.f32.mrb[0].mxu0
    %v463 = vadd.f32 0.0, %v462
    %v464 = vpop.f32.mrb[0].mxu0
    %v465 = vadd.f32 0.0, %v464
    %466 = vdwg.mxu0
    %v467 = vmul.f32 %v392, 0.03125
    %v468 = vmul.f32 %v394, 0.03125
    %v469 = vmul.f32 %v463, 0.03125
    %v470 = vmul.f32 %v465, 0.03125
    %v475 = vcombine.low %v467, %v468
    %v476 = vcombine.high %v467, %v468
    %v477 = vcombine.low %v469, %v470
    %v478 = vcombine.high %v469, %v470
    %v480 = vunpack.c.l.s4 1966171168
    %v481 = vunpack.c.0.s8 %v480
    %v482 = vlaneseq
    %v483 = vshrl.u32 %v482, 7
    %v484 = vsub.s32 %v481, %v483
    %v485 = vrot.slane %v475, %v484
    %v487 = vunpack.c.l.s4 1966171168
    %v488 = vunpack.c.0.s8 %v487
    %v489 = vlaneseq
    %v490 = vshrl.u32 %v489, 7
    %v491 = vsub.s32 %v488, %v490
    %v492 = vrot.slane %v476, %v491
    %v494 = vunpack.c.l.s4 1966171168
    %v495 = vunpack.c.0.s8 %v494
    %v496 = vlaneseq
    %v497 = vshrl.u32 %v496, 7
    %v498 = vsub.s32 %v495, %v497
    %v499 = vrot.slane %v477, %v498
    %v501 = vunpack.c.l.s4 1966171168
    %v502 = vunpack.c.0.s8 %v501
    %v503 = vlaneseq
    %v504 = vshrl.u32 %v503, 7
    %v505 = vsub.s32 %v502, %v504
    %v506 = vrot.slane %v478, %v505
    %v507 = vcombine.low %v485, %v499
    %v508 = vcombine.high %v485, %v499
    %v509 = vcombine.low %v492, %v506
    %v510 = vcombine.high %v492, %v506
    %v512 = vunpack.c.l.s4 1966171168
    %v513 = vunpack.c.0.s8 %v512
    %v514 = vlaneseq
    %v515 = vshrl.u32 %v514, 7
    %v516 = vsub.s32 %v513, %v515
    %v517 = vrot.slane %v507, %v516
    %v519 = vunpack.c.l.s4 1966171168
    %v520 = vunpack.c.0.s8 %v519
    %v521 = vlaneseq
    %v522 = vshrl.u32 %v521, 7
    %v523 = vsub.s32 %v520, %v522
    %v524 = vrot.slane %v509, %v523
    %v526 = vunpack.c.l.s4 1966171168
    %v527 = vunpack.c.0.s8 %v526
    %v528 = vlaneseq
    %v529 = vshrl.u32 %v528, 7
    %v530 = vsub.s32 %v527, %v529
    %v531 = vrot.slane %v508, %v530
    %v533 = vunpack.c.l.s4 1966171168
    %v534 = vunpack.c.0.s8 %v533
    %v535 = vlaneseq
    %v536 = vshrl.u32 %v535, 7
    %v537 = vsub.s32 %v534, %v536
    %v538 = vrot.slane %v510, %v537
    %v539 = vcombine.high %v517, %v517
    %v540 = vcombine.high %v524, %v524
    %v541 = vcombine.high %v531, %v531
    %v542 = vcombine.high %v538, %v538
    %v551 = vsub.f32 %v21, %v517
    %v552 = vsub.f32 %v22, %v531
    %v553 = vsub.f32 %v23, %v539
    %v554 = vsub.f32 %v24, %v541
    %v555 = vsub.f32 %v25, %v524
    %v556 = vsub.f32 %v26, %v538
    %v557 = vsub.f32 %v27, %v540
    %v558 = vsub.f32 %v28, %v542
    %v559 = vmul.f32 %v551, %v551
    %v560 = vmul.f32 %v552, %v552
    %v561 = vmul.f32 %v553, %v553
    %v562 = vmul.f32 %v554, %v554
    %v563 = vmul.f32 %v555, %v555
    %v564 = vmul.f32 %v556, %v556
    %v565 = vmul.f32 %v557, %v557
    %v566 = vmul.f32 %v558, %v558
    %v575 = vcombine.low %v559, %v560
    %v576 = vcombine.low %v561, %v562
    %v577 = vcombine.low %v563, %v564
    %v578 = vcombine.low %v565, %v566
    %v580 = vunpack.c.l.s4 1966171168
    %v581 = vunpack.c.0.s8 %v580
    %v582 = vlaneseq
    %v583 = vshrl.u32 %v582, 7
    %v584 = vsub.s32 %v581, %v583
    %v585 = vrot.slane %v575, %v584
    %v587 = vunpack.c.l.s4 1966171168
    %v588 = vunpack.c.0.s8 %v587
    %v589 = vlaneseq
    %v590 = vshrl.u32 %v589, 7
    %v591 = vsub.s32 %v588, %v590
    %v592 = vrot.slane %v576, %v591
    %v594 = vunpack.c.l.s4 1966171168
    %v595 = vunpack.c.0.s8 %v594
    %v596 = vlaneseq
    %v597 = vshrl.u32 %v596, 7
    %v598 = vsub.s32 %v595, %v597
    %v599 = vrot.slane %v577, %v598
    %v601 = vunpack.c.l.s4 1966171168
    %v602 = vunpack.c.0.s8 %v601
    %v603 = vlaneseq
    %v604 = vshrl.u32 %v603, 7
    %v605 = vsub.s32 %v602, %v604
    %v606 = vrot.slane %v578, %v605
    %v607 = vcombine.low %v585, %v592
    %v608 = vcombine.high %v585, %v592
    %v609 = vcombine.low %v599, %v606
    %v610 = vcombine.high %v599, %v606
    %v612 = vunpack.c.l.s4 1966171168
    %v613 = vunpack.c.0.s8 %v612
    %v614 = vlaneseq
    %v615 = vshrl.u32 %v614, 7
    %v616 = vsub.s32 %v613, %v615
    %v617 = vrot.slane %v607, %v616
    %v619 = vunpack.c.l.s4 1966171168
    %v620 = vunpack.c.0.s8 %v619
    %v621 = vlaneseq
    %v622 = vshrl.u32 %v621, 7
    %v623 = vsub.s32 %v620, %v622
    %v624 = vrot.slane %v608, %v623
    %v626 = vunpack.c.l.s4 1966171168
    %v627 = vunpack.c.0.s8 %v626
    %v628 = vlaneseq
    %v629 = vshrl.u32 %v628, 7
    %v630 = vsub.s32 %v627, %v629
    %v631 = vrot.slane %v609, %v630
    %v633 = vunpack.c.l.s4 1966171168
    %v634 = vunpack.c.0.s8 %v633
    %v635 = vlaneseq
    %v636 = vshrl.u32 %v635, 7
    %v637 = vsub.s32 %v634, %v636
    %v638 = vrot.slane %v610, %v637
    %v639 = vcombine.low %v617, %v631
    %v640 = vcombine.high %v617, %v631
    %v641 = vcombine.low %v624, %v638
    %v642 = vcombine.high %v624, %v638
    %647 = vmatprep.subr.mxu0 0.0
    %648 = vmatpush1.msra.mxu0 %v29
    %649 = vmatprep.subr.mxu0 0.0
    %650 = vmatpush1.msra.mxu0 %v30
    %651 = vmatprep.subr.mxu0 0.0
    %652 = vmatpush1.msra.mxu0 %v31
    %653 = vmatprep.subr.mxu0 0.0
    %654 = vmatpush1.msra.mxu0 %v32
    %655 = vmatprep.subr.mxu0 0.0
    %656 = vmatpush1.msra.mxu0 %v33
    %657 = vmatprep.subr.mxu0 0.0
    %658 = vmatpush1.msra.mxu0 %v34
    %659 = vmatprep.subr.mxu0 0.0
    %660 = vmatpush1.msra.mxu0 %v35
    %661 = vmatprep.subr.mxu0 0.0
    %662 = vmatpush1.msra.mxu0 %v36
    %663 = vmatprep.subr.mxu0 0.0
    %664 = vmatpush1.msra.mxu0 %v37
    %665 = vmatprep.subr.mxu0 0.0
    %666 = vmatpush1.msra.mxu0 %v38
    %667 = vmatprep.subr.mxu0 0.0
    %668 = vmatpush1.msra.mxu0 %v39
    %669 = vmatprep.subr.mxu0 0.0
    %670 = vmatpush1.msra.mxu0 %v40
    %671 = vmatprep.subr.mxu0 0.0
    %672 = vmatpush1.msra.mxu0 %v41
    %673 = vmatprep.subr.mxu0 0.0
    %674 = vmatpush1.msra.mxu0 %v42
    %675 = vmatprep.subr.mxu0 0.0
    %676 = vmatpush1.msra.mxu0 %v43
    %677 = vmatprep.subr.mxu0 0.0
    %678 = vmatpush1.msra.mxu0 %v44
    %679 = vmatprep.subr.mxu0 0.0
    %680 = vmatpush1.msra.mxu0 %v45
    %681 = vmatprep.subr.mxu0 0.0
    %682 = vmatpush1.msra.mxu0 %v46
    %683 = vmatprep.subr.mxu0 0.0
    %684 = vmatpush1.msra.mxu0 %v47
    %685 = vmatprep.subr.mxu0 0.0
    %686 = vmatpush1.msra.mxu0 %v48
    %687 = vmatprep.subr.mxu0 0.0
    %688 = vmatpush1.msra.mxu0 %v49
    %689 = vmatprep.subr.mxu0 0.0
    %690 = vmatpush1.msra.mxu0 %v50
    %691 = vmatprep.subr.mxu0 0.0
    %692 = vmatpush1.msra.mxu0 %v51
    %693 = vmatprep.subr.mxu0 0.0
    %694 = vmatpush1.msra.mxu0 %v52
    %695 = vmatprep.subr.mxu0 0.0
    %696 = vmatpush1.msra.mxu0 %v53
    %697 = vmatprep.subr.mxu0 0.0
    %698 = vmatpush1.msra.mxu0 %v54
    %699 = vmatprep.subr.mxu0 0.0
    %700 = vmatpush1.msra.mxu0 %v55
    %701 = vmatprep.subr.mxu0 0.0
    %702 = vmatpush1.msra.mxu0 %v56
    %703 = vmatprep.subr.mxu0 0.0
    %704 = vmatpush1.msra.mxu0 %v57
    %705 = vmatprep.subr.mxu0 0.0
    %706 = vmatpush1.msra.mxu0 %v58
    %707 = vmatprep.subr.mxu0 0.0
    %708 = vmatpush1.msra.mxu0 %v59
    %709 = vmatprep.subr.mxu0 0.0
    %710 = vmatpush1.msra.mxu0 %v60
    %711 = vmatprep.mubr.f32.mxu0 %v641
    %712 = vmatmul.mubr.f32.gmra.mrb[0].mxu0 %v639
    %v713 = vpop.f32.mrb[0].mxu0
    %v714 = vadd.f32 0.0, %v713
    %v715 = vpop.f32.mrb[0].mxu0
    %716 = vdwg.mxu0
    %717 = vmatprep.subr.mxu0 0.0
    %718 = vmatpush1.msra.mxu0 %v61
    %719 = vmatprep.subr.mxu0 0.0
    %720 = vmatpush1.msra.mxu0 %v62
    %721 = vmatprep.subr.mxu0 0.0
    %722 = vmatpush1.msra.mxu0 %v63
    %723 = vmatprep.subr.mxu0 0.0
    %724 = vmatpush1.msra.mxu0 %v64
    %725 = vmatprep.subr.mxu0 0.0
    %726 = vmatpush1.msra.mxu0 %v65
    %727 = vmatprep.subr.mxu0 0.0
    %728 = vmatpush1.msra.mxu0 %v66
    %729 = vmatprep.subr.mxu0 0.0
    %730 = vmatpush1.msra.mxu0 %v67
    %731 = vmatprep.subr.mxu0 0.0
    %732 = vmatpush1.msra.mxu0 %v68
    %733 = vmatprep.subr.mxu0 0.0
    %734 = vmatpush1.msra.mxu0 %v69
    %735 = vmatprep.subr.mxu0 0.0
    %736 = vmatpush1.msra.mxu0 %v70
    %737 = vmatprep.subr.mxu0 0.0
    %738 = vmatpush1.msra.mxu0 %v71
    %739 = vmatprep.subr.mxu0 0.0
    %740 = vmatpush1.msra.mxu0 %v72
    %741 = vmatprep.subr.mxu0 0.0
    %742 = vmatpush1.msra.mxu0 %v73
    %743 = vmatprep.subr.mxu0 0.0
    %744 = vmatpush1.msra.mxu0 %v74
    %745 = vmatprep.subr.mxu0 0.0
    %746 = vmatpush1.msra.mxu0 %v75
    %747 = vmatprep.subr.mxu0 0.0
    %748 = vmatpush1.msra.mxu0 %v76
    %749 = vmatprep.subr.mxu0 0.0
    %750 = vmatpush1.msra.mxu0 %v77
    %751 = vmatprep.subr.mxu0 0.0
    %752 = vmatpush1.msra.mxu0 %v78
    %753 = vmatprep.subr.mxu0 0.0
    %754 = vmatpush1.msra.mxu0 %v79
    %755 = vmatprep.subr.mxu0 0.0
    %756 = vmatpush1.msra.mxu0 %v80
    %757 = vmatprep.subr.mxu0 0.0
    %758 = vmatpush1.msra.mxu0 %v81
    %759 = vmatprep.subr.mxu0 0.0
    %760 = vmatpush1.msra.mxu0 %v82
    %761 = vmatprep.subr.mxu0 0.0
    %762 = vmatpush1.msra.mxu0 %v83
    %763 = vmatprep.subr.mxu0 0.0
    %764 = vmatpush1.msra.mxu0 %v84
    %765 = vmatprep.subr.mxu0 0.0
    %766 = vmatpush1.msra.mxu0 %v85
    %767 = vmatprep.subr.mxu0 0.0
    %768 = vmatpush1.msra.mxu0 %v86
    %769 = vmatprep.subr.mxu0 0.0
    %770 = vmatpush1.msra.mxu0 %v87
    %771 = vmatprep.subr.mxu0 0.0
    %772 = vmatpush1.msra.mxu0 %v88
    %773 = vmatprep.subr.mxu0 0.0
    %774 = vmatpush1.msra.mxu0 %v89
    %775 = vmatprep.subr.mxu0 0.0
    %776 = vmatpush1.msra.mxu0 %v90
    %777 = vmatprep.subr.mxu0 0.0
    %778 = vmatpush1.msra.mxu0 %v91
    %779 = vmatprep.subr.mxu0 0.0
    %780 = vmatpush1.msra.mxu0 %v92
    %781 = vmatprep.mubr.f32.mxu0 %v642
    %782 = vmatmul.mubr.f32.gmra.mrb[0].mxu0 %v640
    %v783 = vpop.f32.mrb[0].mxu0
    %v784 = vadd.f32 %v714, %v783
    %v785 = vpop.f32.mrb[0].mxu0
    %786 = vdwg.mxu0
    %v788 = vsel %vm321, %v784, 0
    %790 = vmatprep.subr.mxu0 %v94
    %791 = vmatpush1.msra.mxu0 %v93
    %792 = vmatprep.subr.mxu0 %v98
    %793 = vmatpush1.msra.mxu0 %v97
    %794 = vmatprep.subr.mxu0 0.0
    %795 = vmatpush1.msra.mxu0 0.0
    %796 = vmatprep.subr.mxu0 0.0
    %797 = vmatpush1.msra.mxu0 0.0
    %798 = vmatprep.subr.mxu0 0.0
    %799 = vmatpush1.msra.mxu0 0.0
    %800 = vmatprep.subr.mxu0 0.0
    %801 = vmatpush1.msra.mxu0 0.0
    %802 = vmatprep.subr.mxu0 0.0
    %803 = vmatpush1.msra.mxu0 0.0
    %804 = vmatprep.subr.mxu0 0.0
    %805 = vmatpush1.msra.mxu0 0.0
    %806 = vmatprep.subr.mxu0 0.0
    %807 = vmatpush1.msra.mxu0 0.0
    %808 = vmatprep.subr.mxu0 0.0
    %809 = vmatpush1.msra.mxu0 0.0
    %810 = vmatprep.subr.mxu0 0.0
    %811 = vmatpush1.msra.mxu0 0.0
    %812 = vmatprep.subr.mxu0 0.0
    %813 = vmatpush1.msra.mxu0 0.0
    %814 = vmatprep.subr.mxu0 0.0
    %815 = vmatpush1.msra.mxu0 0.0
    %816 = vmatprep.subr.mxu0 0.0
    %817 = vmatpush1.msra.mxu0 0.0
    %818 = vmatprep.subr.mxu0 0.0
    %819 = vmatpush1.msra.mxu0 0.0
    %820 = vmatprep.subr.mxu0 0.0
    %821 = vmatpush1.msra.mxu0 0.0
    %822 = vmatprep.subr.mxu0 0.0
    %823 = vmatpush1.msra.mxu0 0.0
    %824 = vmatprep.subr.mxu0 0.0
    %825 = vmatpush1.msra.mxu0 0.0
    %826 = vmatprep.subr.mxu0 0.0
    %827 = vmatpush1.msra.mxu0 0.0
    %828 = vmatprep.subr.mxu0 0.0
    %829 = vmatpush1.msra.mxu0 0.0
    %830 = vmatprep.subr.mxu0 0.0
    %831 = vmatpush1.msra.mxu0 0.0
    %832 = vmatprep.subr.mxu0 0.0
    %833 = vmatpush1.msra.mxu0 0.0
    %834 = vmatprep.subr.mxu0 0.0
    %835 = vmatpush1.msra.mxu0 0.0
    %836 = vmatprep.subr.mxu0 0.0
    %837 = vmatpush1.msra.mxu0 0.0
    %838 = vmatprep.subr.mxu0 0.0
    %839 = vmatpush1.msra.mxu0 0.0
    %840 = vmatprep.subr.mxu0 0.0
    %841 = vmatpush1.msra.mxu0 0.0
    %842 = vmatprep.subr.mxu0 0.0
    %843 = vmatpush1.msra.mxu0 0.0
    %844 = vmatprep.subr.mxu0 0.0
    %845 = vmatpush1.msra.mxu0 0.0
    %846 = vmatprep.subr.mxu0 0.0
    %847 = vmatpush1.msra.mxu0 0.0
    %848 = vmatprep.subr.mxu0 0.0
    %849 = vmatpush1.msra.mxu0 0.0
    %850 = vmatprep.subr.mxu0 0.0
    %851 = vmatpush1.msra.mxu0 0.0
    %852 = vmatprep.subr.mxu0 0.0
    %853 = vmatpush1.msra.mxu0 0.0
    %854 = vmatprep.mubr.f32.mxu0 0.0
    %855 = vmatmul.mubr.f32.gmra.mrb[0].mxu0 %v788
    %v856 = vpop.f32.mrb[0].mxu0
    %v857 = vadd.f32 0.0, %v856
    %v858 = vpop.f32.mrb[0].mxu0
    %v859 = vadd.f32 0.0, %v858
    %860 = vdwg.mxu0
    %861 = vmatprep.subr.mxu0 %v96
    %862 = vmatpush1.msra.mxu0 %v95
    %863 = vmatprep.subr.mxu0 %v100
    %864 = vmatpush1.msra.mxu0 %v99
    %865 = vmatprep.subr.mxu0 0.0
    %866 = vmatpush1.msra.mxu0 0.0
    %867 = vmatprep.subr.mxu0 0.0
    %868 = vmatpush1.msra.mxu0 0.0
    %869 = vmatprep.subr.mxu0 0.0
    %870 = vmatpush1.msra.mxu0 0.0
    %871 = vmatprep.subr.mxu0 0.0
    %872 = vmatpush1.msra.mxu0 0.0
    %873 = vmatprep.subr.mxu0 0.0
    %874 = vmatpush1.msra.mxu0 0.0
    %875 = vmatprep.subr.mxu0 0.0
    %876 = vmatpush1.msra.mxu0 0.0
    %877 = vmatprep.subr.mxu0 0.0
    %878 = vmatpush1.msra.mxu0 0.0
    %879 = vmatprep.subr.mxu0 0.0
    %880 = vmatpush1.msra.mxu0 0.0
    %881 = vmatprep.subr.mxu0 0.0
    %882 = vmatpush1.msra.mxu0 0.0
    %883 = vmatprep.subr.mxu0 0.0
    %884 = vmatpush1.msra.mxu0 0.0
    %885 = vmatprep.subr.mxu0 0.0
    %886 = vmatpush1.msra.mxu0 0.0
    %887 = vmatprep.subr.mxu0 0.0
    %888 = vmatpush1.msra.mxu0 0.0
    %889 = vmatprep.subr.mxu0 0.0
    %890 = vmatpush1.msra.mxu0 0.0
    %891 = vmatprep.subr.mxu0 0.0
    %892 = vmatpush1.msra.mxu0 0.0
    %893 = vmatprep.subr.mxu0 0.0
    %894 = vmatpush1.msra.mxu0 0.0
    %895 = vmatprep.subr.mxu0 0.0
    %896 = vmatpush1.msra.mxu0 0.0
    %897 = vmatprep.subr.mxu0 0.0
    %898 = vmatpush1.msra.mxu0 0.0
    %899 = vmatprep.subr.mxu0 0.0
    %900 = vmatpush1.msra.mxu0 0.0
    %901 = vmatprep.subr.mxu0 0.0
    %902 = vmatpush1.msra.mxu0 0.0
    %903 = vmatprep.subr.mxu0 0.0
    %904 = vmatpush1.msra.mxu0 0.0
    %905 = vmatprep.subr.mxu0 0.0
    %906 = vmatpush1.msra.mxu0 0.0
    %907 = vmatprep.subr.mxu0 0.0
    %908 = vmatpush1.msra.mxu0 0.0
    %909 = vmatprep.subr.mxu0 0.0
    %910 = vmatpush1.msra.mxu0 0.0
    %911 = vmatprep.subr.mxu0 0.0
    %912 = vmatpush1.msra.mxu0 0.0
    %913 = vmatprep.subr.mxu0 0.0
    %914 = vmatpush1.msra.mxu0 0.0
    %915 = vmatprep.subr.mxu0 0.0
    %916 = vmatpush1.msra.mxu0 0.0
    %917 = vmatprep.subr.mxu0 0.0
    %918 = vmatpush1.msra.mxu0 0.0
    %919 = vmatprep.subr.mxu0 0.0
    %920 = vmatpush1.msra.mxu0 0.0
    %921 = vmatprep.subr.mxu0 0.0
    %922 = vmatpush1.msra.mxu0 0.0
    %923 = vmatprep.subr.mxu0 0.0
    %924 = vmatpush1.msra.mxu0 0.0
    %925 = vmatprep.mubr.f32.mxu0 0.0
    %926 = vmatmul.mubr.f32.gmra.mrb[0].mxu0 %v788
    %v927 = vpop.f32.mrb[0].mxu0
    %v928 = vadd.f32 0.0, %v927
    %v929 = vpop.f32.mrb[0].mxu0
    %v930 = vadd.f32 0.0, %v929
    %931 = vdwg.mxu0
    %v932 = vmul.f32 %v857, 0.03125
    %v933 = vmul.f32 %v859, 0.03125
    %v934 = vmul.f32 %v928, 0.03125
    %v935 = vmul.f32 %v930, 0.03125
    %v936 = vadd.f32 %v932, 1e-05
    %v937 = vadd.f32 %v933, 1e-05
    %v938 = vadd.f32 %v934, 1e-05
    %v939 = vadd.f32 %v935, 1e-05
    %v940 = vrsqrt.pop %v936
    %v941 = vrsqrt.pop %v937
    %v942 = vrsqrt.pop %v938
    %v943 = vrsqrt.pop %v939
    %v948 = vcombine.low %v940, %v941
    %v949 = vcombine.high %v940, %v941
    %v950 = vcombine.low %v942, %v943
    %v951 = vcombine.high %v942, %v943
    %v953 = vunpack.c.l.s4 1966171168
    %v954 = vunpack.c.0.s8 %v953
    %v955 = vlaneseq
    %v956 = vshrl.u32 %v955, 7
    %v957 = vsub.s32 %v954, %v956
    %v958 = vrot.slane %v948, %v957
    %v960 = vunpack.c.l.s4 1966171168
    %v961 = vunpack.c.0.s8 %v960
    %v962 = vlaneseq
    %v963 = vshrl.u32 %v962, 7
    %v964 = vsub.s32 %v961, %v963
    %v965 = vrot.slane %v949, %v964
    %v967 = vunpack.c.l.s4 1966171168
    %v968 = vunpack.c.0.s8 %v967
    %v969 = vlaneseq
    %v970 = vshrl.u32 %v969, 7
    %v971 = vsub.s32 %v968, %v970
    %v972 = vrot.slane %v950, %v971
    %v974 = vunpack.c.l.s4 1966171168
    %v975 = vunpack.c.0.s8 %v974
    %v976 = vlaneseq
    %v977 = vshrl.u32 %v976, 7
    %v978 = vsub.s32 %v975, %v977
    %v979 = vrot.slane %v951, %v978
    %v980 = vcombine.low %v958, %v972
    %v981 = vcombine.high %v958, %v972
    %v982 = vcombine.low %v965, %v979
    %v983 = vcombine.high %v965, %v979
    %v985 = vunpack.c.l.s4 1966171168
    %v986 = vunpack.c.0.s8 %v985
    %v987 = vlaneseq
    %v988 = vshrl.u32 %v987, 7
    %v989 = vsub.s32 %v986, %v988
    %v990 = vrot.slane %v980, %v989
    %v992 = vunpack.c.l.s4 1966171168
    %v993 = vunpack.c.0.s8 %v992
    %v994 = vlaneseq
    %v995 = vshrl.u32 %v994, 7
    %v996 = vsub.s32 %v993, %v995
    %v997 = vrot.slane %v982, %v996
    %v999 = vunpack.c.l.s4 1966171168
    %v1000 = vunpack.c.0.s8 %v999
    %v1001 = vlaneseq
    %v1002 = vshrl.u32 %v1001, 7
    %v1003 = vsub.s32 %v1000, %v1002
    %v1004 = vrot.slane %v981, %v1003
    %v1006 = vunpack.c.l.s4 1966171168
    %v1007 = vunpack.c.0.s8 %v1006
    %v1008 = vlaneseq
    %v1009 = vshrl.u32 %v1008, 7
    %v1010 = vsub.s32 %v1007, %v1009
    %v1011 = vrot.slane %v983, %v1010
    %v1012 = vcombine.high %v990, %v990
    %v1013 = vcombine.high %v997, %v997
    %v1014 = vcombine.high %v1004, %v1004
    %v1015 = vcombine.high %v1011, %v1011
    %v1024 = vmul.f32 %v551, %v990
    %v1025 = vmul.f32 %v552, %v1004
    %v1026 = vmul.f32 %v553, %v1012
    %v1027 = vmul.f32 %v554, %v1014
    %v1028 = vmul.f32 %v555, %v997
    %v1029 = vmul.f32 %v556, %v1011
    %v1030 = vmul.f32 %v557, %v1013
    %v1031 = vmul.f32 %v558, %v1015
    %v1032 = vld [vmem:[%s1] sm:$0xf]
    %v1034 = vlaneseq
    %v1035 = vshrl.u32 %v1034, 7
    %v1036 = vsub.s32 0, %v1035
    %v1037 = vrot.slane %v1032, %v1036
    %v1038 = vlaneseq
    %v1039 = vshrl.u32 %v1038, 7
    %v1040 = vsub.s32 1, %v1039
    %v1041 = vrot.slane %v1032, %v1040
    %v1042 = vlaneseq
    %v1043 = vshrl.u32 %v1042, 7
    %v1044 = vsub.s32 2, %v1043
    %v1045 = vrot.slane %v1032, %v1044
    %v1046 = vlaneseq
    %v1047 = vshrl.u32 %v1046, 7
    %v1048 = vsub.s32 3, %v1047
    %v1049 = vrot.slane %v1032, %v1048
    %v1050 = vcombine.low %v1037, %v1041
    %v1051 = vcombine.high %v1037, %v1041
    %v1052 = vcombine.low %v1045, %v1049
    %v1053 = vcombine.high %v1045, %v1049
    %v1055 = vunpack.c.l.s4 1966171168
    %v1056 = vunpack.c.0.s8 %v1055
    %v1057 = vlaneseq
    %v1058 = vshrl.u32 %v1057, 7
    %v1059 = vsub.s32 %v1056, %v1058
    %v1060 = vrot.slane %v1050, %v1059
    %v1062 = vunpack.c.l.s4 1966171168
    %v1063 = vunpack.c.0.s8 %v1062
    %v1064 = vlaneseq
    %v1065 = vshrl.u32 %v1064, 7
    %v1066 = vsub.s32 %v1063, %v1065
    %v1067 = vrot.slane %v1051, %v1066
    %v1069 = vunpack.c.l.s4 1966171168
    %v1070 = vunpack.c.0.s8 %v1069
    %v1071 = vlaneseq
    %v1072 = vshrl.u32 %v1071, 7
    %v1073 = vsub.s32 %v1070, %v1072
    %v1074 = vrot.slane %v1052, %v1073
    %v1076 = vunpack.c.l.s4 1966171168
    %v1077 = vunpack.c.0.s8 %v1076
    %v1078 = vlaneseq
    %v1079 = vshrl.u32 %v1078, 7
    %v1080 = vsub.s32 %v1077, %v1079
    %v1081 = vrot.slane %v1053, %v1080
    %v1082 = vcombine.low %v1060, %v1074
    %v1083 = vcombine.high %v1060, %v1074
    %v1084 = vcombine.low %v1067, %v1081
    %v1085 = vcombine.high %v1067, %v1081
    %v1087 = vunpack.c.l.s4 1966171168
    %v1088 = vunpack.c.0.s8 %v1087
    %v1089 = vlaneseq
    %v1090 = vshrl.u32 %v1089, 7
    %v1091 = vsub.s32 %v1088, %v1090
    %v1092 = vrot.slane %v1082, %v1091
    %v1094 = vunpack.c.l.s4 1966171168
    %v1095 = vunpack.c.0.s8 %v1094
    %v1096 = vlaneseq
    %v1097 = vshrl.u32 %v1096, 7
    %v1098 = vsub.s32 %v1095, %v1097
    %v1099 = vrot.slane %v1084, %v1098
    %v1101 = vunpack.c.l.s4 1966171168
    %v1102 = vunpack.c.0.s8 %v1101
    %v1103 = vlaneseq
    %v1104 = vshrl.u32 %v1103, 7
    %v1105 = vsub.s32 %v1102, %v1104
    %v1106 = vrot.slane %v1083, %v1105
    %v1108 = vunpack.c.l.s4 1966171168
    %v1109 = vunpack.c.0.s8 %v1108
    %v1110 = vlaneseq
    %v1111 = vshrl.u32 %v1110, 7
    %v1112 = vsub.s32 %v1109, %v1111
    %v1113 = vrot.slane %v1085, %v1112
    %v1114 = vcombine.high %v1092, %v1092
    %v1115 = vcombine.high %v1099, %v1099
    %v1116 = vcombine.high %v1106, %v1106
    %v1117 = vcombine.high %v1113, %v1113
    %v1126 = vmul.f32 %v1024, %v1092
    %v1127 = vmul.f32 %v1025, %v1106
    %v1128 = vmul.f32 %v1026, %v1114
    %v1129 = vmul.f32 %v1027, %v1116
    %v1130 = vmul.f32 %v1028, %v1099
    %v1131 = vmul.f32 %v1029, %v1113
    %v1132 = vmul.f32 %v1030, %v1115
    %v1133 = vmul.f32 %v1031, %v1117
    %v1134 = vld [vmem:[%s2] sm:$0xf]
    %v1136 = vlaneseq
    %v1137 = vshrl.u32 %v1136, 7
    %v1138 = vsub.s32 0, %v1137
    %v1139 = vrot.slane %v1134, %v1138
    %v1140 = vlaneseq
    %v1141 = vshrl.u32 %v1140, 7
    %v1142 = vsub.s32 1, %v1141
    %v1143 = vrot.slane %v1134, %v1142
    %v1144 = vlaneseq
    %v1145 = vshrl.u32 %v1144, 7
    %v1146 = vsub.s32 2, %v1145
    %v1147 = vrot.slane %v1134, %v1146
    %v1148 = vlaneseq
    %v1149 = vshrl.u32 %v1148, 7
    %v1150 = vsub.s32 3, %v1149
    %v1151 = vrot.slane %v1134, %v1150
    %v1152 = vcombine.low %v1139, %v1143
    %v1153 = vcombine.high %v1139, %v1143
    %v1154 = vcombine.low %v1147, %v1151
    %v1155 = vcombine.high %v1147, %v1151
    %v1157 = vunpack.c.l.s4 1966171168
    %v1158 = vunpack.c.0.s8 %v1157
    %v1159 = vlaneseq
    %v1160 = vshrl.u32 %v1159, 7
    %v1161 = vsub.s32 %v1158, %v1160
    %v1162 = vrot.slane %v1152, %v1161
    %v1164 = vunpack.c.l.s4 1966171168
    %v1165 = vunpack.c.0.s8 %v1164
    %v1166 = vlaneseq
    %v1167 = vshrl.u32 %v1166, 7
    %v1168 = vsub.s32 %v1165, %v1167
    %v1169 = vrot.slane %v1153, %v1168
    %v1171 = vunpack.c.l.s4 1966171168
    %v1172 = vunpack.c.0.s8 %v1171
    %v1173 = vlaneseq
    %v1174 = vshrl.u32 %v1173, 7
    %v1175 = vsub.s32 %v1172, %v1174
    %v1176 = vrot.slane %v1154, %v1175
    %v1178 = vunpack.c.l.s4 1966171168
    %v1179 = vunpack.c.0.s8 %v1178
    %v1180 = vlaneseq
    %v1181 = vshrl.u32 %v1180, 7
    %v1182 = vsub.s32 %v1179, %v1181
    %v1183 = vrot.slane %v1155, %v1182
    %v1184 = vcombine.low %v1162, %v1176
    %v1185 = vcombine.high %v1162, %v1176
    %v1186 = vcombine.low %v1169, %v1183
    %v1187 = vcombine.high %v1169, %v1183
    %v1189 = vunpack.c.l.s4 1966171168
    %v1190 = vunpack.c.0.s8 %v1189
    %v1191 = vlaneseq
    %v1192 = vshrl.u32 %v1191, 7
    %v1193 = vsub.s32 %v1190, %v1192
    %v1194 = vrot.slane %v1184, %v1193
    %v1196 = vunpack.c.l.s4 1966171168
    %v1197 = vunpack.c.0.s8 %v1196
    %v1198 = vlaneseq
    %v1199 = vshrl.u32 %v1198, 7
    %v1200 = vsub.s32 %v1197, %v1199
    %v1201 = vrot.slane %v1186, %v1200
    %v1203 = vunpack.c.l.s4 1966171168
    %v1204 = vunpack.c.0.s8 %v1203
    %v1205 = vlaneseq
    %v1206 = vshrl.u32 %v1205, 7
    %v1207 = vsub.s32 %v1204, %v1206
    %v1208 = vrot.slane %v1185, %v1207
    %v1210 = vunpack.c.l.s4 1966171168
    %v1211 = vunpack.c.0.s8 %v1210
    %v1212 = vlaneseq
    %v1213 = vshrl.u32 %v1212, 7
    %v1214 = vsub.s32 %v1211, %v1213
    %v1215 = vrot.slane %v1187, %v1214
    %v1216 = vcombine.high %v1194, %v1194
    %v1217 = vcombine.high %v1201, %v1201
    %v1218 = vcombine.high %v1208, %v1208
    %v1219 = vcombine.high %v1215, %v1215
    %v1228 = vadd.f32 %v1126, %v1194
    %v1229 = vadd.f32 %v1127, %v1208
    %v1230 = vadd.f32 %v1128, %v1216
    %v1231 = vadd.f32 %v1129, %v1218
    %v1232 = vadd.f32 %v1130, %v1201
    %v1233 = vadd.f32 %v1131, %v1215
    %v1234 = vadd.f32 %v1132, %v1217
    %v1235 = vadd.f32 %v1133, %v1219
    %v1236 = vlaneseq
    %vm1237 = vcmp.ge.s32.totalorder %v1236, 0
    %vm1238 = vcmp.lt.s32.totalorder %v1236, 512
    %vm1239 = vmand %vm1237, %vm1238
    %1240 = vst.msk [vmem:[#allocation2] sm:$0xf] %vm1239, %v1228
    %1241 = vst.msk [vmem:[#allocation2 + $0x4] sm:$0xf] %vm1239, %v1229
    %1242 = vst.msk [vmem:[#allocation2 + $0x8] sm:$0xf] %vm1239, %v1230
    %1243 = vst.msk [vmem:[#allocation2 + $0xc] sm:$0xf] %vm1239, %v1231
    %1244 = vst.msk [vmem:[#allocation2 + $0x10] sm:$0xf] %vm1239, %v1232
    %1245 = vst.msk [vmem:[#allocation2 + $0x14] sm:$0xf] %vm1239, %v1233
    %1246 = vst.msk [vmem:[#allocation2 + $0x18] sm:$0xf] %vm1239, %v1234
    %1247 = vst.msk [vmem:[#allocation2 + $0x1c] sm:$0xf] %vm1239, %v1235
    // Predicated region
    $region22: #{tpu_custom_call.1} parent=1 // pred_check
      _
    $region23: #{tpu_custom_call.1} parent=1 // pred_check_branch
      %1249 = sbr.rel (0) target = $region25
    $region24: #{tpu_custom_call.1} parent=1 // pred_region
      %s1251 = ssub.s32 512, 64
      %1252 = vsyncadd [#allocation3], %s1251
      %s1253 = sshll.u32 [#allocation2], 4
      %s1254 = int_to_ptr.vmem [resolvable:$true] %s1253
      %1259 = dma.vmem_to_hbm [thread:$0]  %s1254, 64, %s5, [#allocation3], 64, 64, 4
    $region25: #{tpu_custom_call.1} parent=1 // pred_fallthru
      _
    // Predicated region
    $region26: #{tpu_custom_call.1} parent=1 // pred_check
      _
    $region27: #{tpu_custom_call.1} parent=1 // pred_check_branch
      %1261 = sbr.rel (0) target = $region29
    $region28: #{tpu_custom_call.1} parent=1 // pred_region
      %1262 = dma.done [#allocation3], 512
    $region29: #{tpu_custom_call.1} parent=1 // pred_fallthru
      _
    %1263 = vsyncpa [#allocation3], 1

</llo_original>
